<compile_context>
chip_gen: v6e
topology: v6e:2x2x1
jax: 0.10.0
libtpu: 0.0.40
codegen_flags: <defaults>
</compile_context>

<pallas_src>
import functools

import jax
import jax.numpy as jnp
from jax.experimental import pallas as pl
from jax.experimental.pallas import tpu as pltpu


# f32 sigmoid(x) rounds to exactly 0 (TPU flush-to-zero) for x below ~log of
# the smallest normal.  TODO(synk): torch-CPU keeps denormals, so its sigmoid
# stays nonzero down to x ~ -103.97; only the zero-test depends on this.
_SIGMOID_ZERO_CUTOFF_F32 = -87.3365

_MAX_LANE_TILE = 16 * 1024   # bounds the unrolled lane-fold length


def _round_up(x, m):
    return (x + m - 1) // m * m


def _sublane_granularity(dtype):
    # Minimum second-minor block multiple for packed dtypes: f32->8, bf16->16, u8->32.
    return {1: 32, 2: 16, 4: 8}.get(jnp.dtype(dtype).itemsize, 8)


def _vmem_capacity_bytes():
    try:
        cap = getattr(pltpu.get_tpu_info(), "vmem_capacity_bytes", None)
        if cap:
            return int(cap)
    except Exception:
        pass
    return 128 * 1024 * 1024   # v5e / v6e default; also fine for interpret mode


def _choose_tiles(N, L, sub_g, bytes_per_pair, input_budget_bytes):
    """Pick (row_tile, lane_tile).

    * The double-buffered pair of input blocks stays under input_budget_bytes.
    * lane_tile is as wide as possible (full padded row when it fits) so each
      row needs few lane passes and all stores stay lane-dense.
    * The row ("parallel") axis keeps ~4 blocks when N allows, so both v7x
      TensorCores get work; on single-TC v5e/v6e the extra grid steps cost
      ~0.35us each, which is noise for an HBM-streaming kernel.
    """
    L128 = _round_up(L, 128)
    max_elems = max(sub_g * 128, input_budget_bytes // (2 * bytes_per_pair))
    if sub_g * L128 <= max_elems:
        lane_tile = min(L128, _MAX_LANE_TILE)     # whole (padded) row per block
    else:
        lane_tile = max(128, (max_elems // sub_g) // 128 * 128)
        lane_tile = min(lane_tile, _MAX_LANE_TILE)
    rows_fit = max(sub_g, (max_elems // lane_tile) // sub_g * sub_g)
    rows_target = max(sub_g, _round_up(pl.cdiv(N, 4), sub_g))   # ~4 row blocks
    row_tile = max(sub_g, min(rows_fit, rows_target, 512, _round_up(N, sub_g)))
    return row_tile, lane_tile


def _fold_lanes_to_128(x):
    """Fold (rows, k*128) -> (rows, 128) with pure VALU adds (no XLU)."""
    n = x.shape[-1] // 128
    acc = x[:, 0:128]
    for k in range(1, n):
        acc = acc + x[:, k * 128:(k + 1) * 128]
    return acc


def _dice_loss_kernel(gt_ref, pr_ref, loss_ref, tp_acc, spg_acc, *,
                      activation, eps, n_rows, n_cols, row_tile, lane_tile,
                      mask_lanes):
    i = pl.program_id(0)          # row-block index   ("parallel")
    j = pl.program_id(1)          # lane-block index  ("arbitrary", innermost)

    @pl.when(j == 0)
    def _init():
        tp_acc[...] = jnp.zeros_like(tp_acc)
        spg_acc[...] = jnp.zeros_like(spg_acc)

    pr = pr_ref[...]
    gt = gt_ref[...]

    if activation == "sigmoid":
        # Only the zero-test of sigmoid(pred) is needed; a threshold compare
        # replaces the per-element exp + divide.
        pr_nz = pr > _SIGMOID_ZERO_CUTOFF_F32
    else:
        pr_nz = pr != 0           # native-dtype compare (no int32 upcast)
    gt_nz = gt != 0

    if mask_lanes:
        # Kill the lane tail of the last column block (and any garbage the
        # boundary DMA left in the padded part of the VMEM buffer).
        col = j * lane_tile + jax.lax.broadcasted_iota(jnp.int32, pr_nz.shape, 1)
        valid = col < n_cols
        pr_nz = jnp.logical_and(pr_nz, valid)
        gt_nz = jnp.logical_and(gt_nz, valid)

    pr_f = pr_nz.astype(jnp.float32)
    gt_f = gt_nz.astype(jnp.float32)

    # Lane-wide partial sums; cross-lane (XLU) reduce is deferred to finalize.
    tp_acc[...] += _fold_lanes_to_128(pr_f * gt_f)
    spg_acc[...] += _fold_lanes_to_128(pr_f + gt_f)

    @pl.when(j == pl.num_programs(1) - 1)
    def _finalize():
        tp = jnp.sum(tp_acc[...], axis=1, keepdims=True)     # (row_tile, 1)
        spg = jnp.sum(spg_acc[...], axis=1, keepdims=True)   # = 2*tp + fp + fn
        loss = (2.0 * tp + eps) / (spg + eps)
        # Rows past N exist only inside the last (partial) row block.
        rows = i * row_tile + jax.lax.broadcasted_iota(jnp.int32, loss.shape, 0)
        loss_ref[...] = jnp.where(rows < n_rows, loss, 0.0)


def dice_coeff(gt, pred, *, eps=1.0, activation="none",
               row_tile=None, lane_tile=None, input_vmem_budget_bytes=None):
    """JAX/Pallas equivalent of diceCoeff.forward on in-memory images.

    gt, pred: 2-D arrays (N, L); float32 / bfloat16 / uint8 all work.
    Returns scalar float32: mean per-row dice.
    """
    if activation not in (None, "none", "sigmoid"):
        # TODO(synk): 'softmax2d' needs a 4-D NCHW tensor; not meaningful for
        # the 2-D grayscale-image path this forward exercises.
        raise NotImplementedError("Activation implemented for sigmoid/none")
    assert gt.ndim == 2 and gt.shape == pred.shape
    N, L = gt.shape

    vmem_cap = _vmem_capacity_bytes()
    if input_vmem_budget_bytes is None:
        # ~half of VMEM for the double-buffered input pair:
        # 64 MiB on v5e/v6e (128 MiB VMEM), 32 MiB on v7x (64 MiB VMEM).
        input_vmem_budget_bytes = vmem_cap // 2
    vmem_limit = min(3 * vmem_cap // 4, 112 * 1024 * 1024)

    sub_g = max(_sublane_granularity(gt.dtype), _sublane_granularity(pred.dtype))
    bytes_per_pair = jnp.dtype(gt.dtype).itemsize + jnp.dtype(pred.dtype).itemsize
    auto_rt, auto_lt = _choose_tiles(N, L, sub_g, bytes_per_pair,
                                     input_vmem_budget_bytes)
    row_tile = auto_rt if row_tile is None else _round_up(max(row_tile, sub_g), sub_g)
    lane_tile = auto_lt if lane_tile is None else _round_up(max(lane_tile, 128), 128)

    grid = (pl.cdiv(N, row_tile), pl.cdiv(L, lane_tile))
    kernel = functools.partial(
        _dice_loss_kernel, activation=activation, eps=float(eps),
        n_rows=N, n_cols=L, row_tile=row_tile, lane_tile=lane_tile,
        mask_lanes=(L % lane_tile != 0))

    in_spec = pl.BlockSpec((row_tile, lane_tile), lambda i, j: (i, j))
    out_spec = pl.BlockSpec((row_tile, 1), lambda i, j: (i, 0))

    loss = pl.pallas_call(
        kernel,
        grid=grid,
        in_specs=[in_spec, in_spec],
        out_specs=out_spec,
        out_shape=jax.ShapeDtypeStruct((N, 1), jnp.float32),
        scratch_shapes=[pltpu.VMEM((row_tile, 128), jnp.float32)] * 2,
        compiler_params=pltpu.CompilerParams(
            dimension_semantics=("parallel", "arbitrary"),
            vmem_limit_bytes=vmem_limit,
        ),
    )(gt, pred)

    return jnp.sum(loss) / N


def _reference(gt, pred, eps, activation):
    """Plain-JAX reference matching the PyTorch semantics."""
    pr = pred
    if activation == "sigmoid":
        pr = jax.nn.sigmoid(pr.astype(jnp.float32))
    pr_nz = pr != 0
    gt_nz = gt != 0
    tp = jnp.sum(pr_nz & gt_nz, axis=1).astype(jnp.float32)
    fp = jnp.sum(pr_nz & ~gt_nz, axis=1).astype(jnp.float32)
    fn = jnp.sum(~pr_nz & gt_nz, axis=1).astype(jnp.float32)
    loss = (2.0 * tp + eps) / (2.0 * tp + fp + fn + eps)
    return jnp.sum(loss) / gt.shape[0]


if __name__ == "__main__":
    key = jax.random.PRNGKey(0)
    kg, kp, ks = jax.random.split(key, 3)

    # Small synthetic "grayscale images": 48 rows x 300 cols; deliberately not
    # multiples of the tile sizes so the in-kernel row/lane masking is hit.
    N, L = 48, 300
    gt_u8 = jax.random.randint(kg, (N, L), 0, 3).astype(jnp.uint8)
    pr_u8 = jax.random.randint(kp, (N, L), 0, 3).astype(jnp.uint8)
    eps = 1.0

    # 1) uint8 inputs (4x less HBM traffic than f32), auto tiling, partial
    #    blocks on both axes.
    out = jax.block_until_ready(dice_coeff(gt_u8, pr_u8, eps=eps))
    ref = _reference(gt_u8, pr_u8, eps, "none")
    assert jnp.allclose(out, ref, atol=1e-5, rtol=1e-5), (out, ref)

    # 2) float32 inputs, forced small tiles so both grid axes have several
    #    blocks and the accumulator + lane-fold + masking paths are exercised.
    gt_f = gt_u8.astype(jnp.float32)
    pr_f = pr_u8.astype(jnp.float32)
    out_f = jax.block_until_ready(
        dice_coeff(gt_f, pr_f, eps=eps, row_tile=32, lane_tile=128))
    ref_f = _reference(gt_f, pr_f, eps, "none")
    assert jnp.allclose(out_f, ref_f, atol=1e-5, rtol=1e-5), (out_f, ref_f)

    # 3) sigmoid activation path (regression test for the padded-column bug).
    pr_s = jax.random.normal(ks, (N, L), dtype=jnp.float32)
    out_s = jax.block_until_ready(
        dice_coeff(gt_f, pr_s, eps=eps, activation="sigmoid"))
    ref_s = _reference(gt_f, pr_s, eps, "sigmoid")
    assert jnp.allclose(out_s, ref_s, atol=1e-5, rtol=1e-5), (out_s, ref_s)

    # 4) shapes that divide the tiles exactly (no-masking fast path).
    gt4 = jax.random.randint(kg, (16, 256), 0, 2).astype(jnp.float32)
    pr4 = jax.random.randint(kp, (16, 256), 0, 2).astype(jnp.float32)
    out4 = jax.block_until_ready(dice_coeff(gt4, pr4, eps=eps))
    ref4 = _reference(gt4, pr4, eps, "none")
    assert jnp.allclose(out4, ref4, atol=1e-5, rtol=1e-5), (out4, ref4)

    print("KERNEL_OK")
</pallas_src>

<mosaic_0001>
module attributes {stable_mosaic.version = 11 : i64} {
  func.func @_dice_loss_kernel(%arg0: i32, %arg1: i32, %arg2: memref<32x384xi8, #tpu.memory_space<vmem>>, %arg3: memref<32x384xi8, #tpu.memory_space<vmem>>, %arg4: memref<32x1xf32, #tpu.memory_space<vmem>>, %arg5: memref<32x128xf32, #tpu.memory_space<vmem>>, %arg6: memref<32x128xf32, #tpu.memory_space<vmem>>) attributes {dimension_semantics = [#tpu.dimension_semantics<parallel>, #tpu.dimension_semantics<arbitrary>], iteration_bounds = array<i64: 2, 1>, scalar_prefetch = 0 : i64, scratch_operands = 2 : i64, tpu.core_type = #tpu.core_type<tc>, window_params = [{transform_indices = @transform_0, window_bounds = array<i64: 32, 384>}, {transform_indices = @transform_1, window_bounds = array<i64: 32, 384>}, {transform_indices = @transform_2, window_bounds = array<i64: 32, 1>}]} {
    %c0_i32 = arith.constant 0 : i32
    %0 = arith.cmpi eq, %arg1, %c0_i32 : i32
    %1 = arith.extui %0 : i1 to i32
    %c0_i32_0 = arith.constant 0 : i32
    %2 = arith.cmpi ne, %1, %c0_i32_0 : i32
    scf.if %2 {
      %cst = arith.constant 0.000000e+00 : f32
      %42 = vector.broadcast %cst : f32 to vector<32x128xf32>
      %c0_15 = arith.constant 0 : index
      %c0_16 = arith.constant 0 : index
      %43 = vector.load %arg5[%c0_15, %c0_16] : memref<32x128xf32, #tpu.memory_space<vmem>>, vector<32x128xf32>
      tpu.vector_store %arg5[%c0_15, %c0_16], %42 {strides = array<i32>} : memref<32x128xf32, #tpu.memory_space<vmem>>, vector<32x128xf32>,
      %cst_17 = arith.constant 0.000000e+00 : f32
      %44 = vector.broadcast %cst_17 : f32 to vector<32x128xf32>
      %c0_18 = arith.constant 0 : index
      %c0_19 = arith.constant 0 : index
      %45 = vector.load %arg6[%c0_18, %c0_19] : memref<32x128xf32, #tpu.memory_space<vmem>>, vector<32x128xf32>
      tpu.vector_store %arg6[%c0_18, %c0_19], %44 {strides = array<i32>} : memref<32x128xf32, #tpu.memory_space<vmem>>, vector<32x128xf32>,
    } else {
    }
    %c0 = arith.constant 0 : index
    %c0_1 = arith.constant 0 : index
    %3 = vector.load %arg3[%c0, %c0_1] : memref<32x384xi8, #tpu.memory_space<vmem>>, vector<32x384xi8>
    %c0_2 = arith.constant 0 : index
    %c0_3 = arith.constant 0 : index
    %4 = vector.load %arg2[%c0_2, %c0_3] : memref<32x384xi8, #tpu.memory_space<vmem>>, vector<32x384xi8>
    %c0_i8 = arith.constant 0 : i8
    %5 = vector.broadcast %c0_i8 : i8 to vector<32x384xi8>
    %6 = arith.cmpi ne, %3, %5 : vector<32x384xi8>
    %c0_i8_4 = arith.constant 0 : i8
    %7 = vector.broadcast %c0_i8_4 : i8 to vector<32x384xi8>
    %8 = arith.cmpi ne, %4, %7 : vector<32x384xi8>
    %c384_i32 = arith.constant 384 : i32
    %9 = arith.muli %arg1, %c384_i32 : i32
    %10 = tpu.iota {dimensions = array<i32: 1>} : vector<32x384xi32>
    %11 = vector.broadcast %9 : i32 to vector<32x384xi32>
    %12 = arith.addi %11, %10 : vector<32x384xi32>
    %c300_i32 = arith.constant 300 : i32
    %13 = vector.broadcast %c300_i32 : i32 to vector<32x384xi32>
    %14 = arith.cmpi slt, %12, %13 : vector<32x384xi32>
    %15 = arith.andi %6, %14 : vector<32x384xi1>
    %16 = arith.andi %8, %14 : vector<32x384xi1>
    %17 = arith.extui %15 : vector<32x384xi1> to vector<32x384xi32>
    %18 = arith.sitofp %17 : vector<32x384xi32> to vector<32x384xf32>
    %19 = arith.extui %16 : vector<32x384xi1> to vector<32x384xi32>
    %20 = arith.sitofp %19 : vector<32x384xi32> to vector<32x384xf32>
    %c0_5 = arith.constant 0 : index
    %c0_6 = arith.constant 0 : index
    %21 = vector.load %arg5[%c0_5, %c0_6] : memref<32x128xf32, #tpu.memory_space<vmem>>, vector<32x128xf32>
    %22 = arith.mulf %18, %20 : vector<32x384xf32>
    %23 = vector.extract_strided_slice %22 {offsets = [0, 0], sizes = [32, 128], strides = [1, 1]} : vector<32x384xf32> to vector<32x128xf32>
    %24 = vector.extract_strided_slice %22 {offsets = [0, 128], sizes = [32, 128], strides = [1, 1]} : vector<32x384xf32> to vector<32x128xf32>
    %25 = arith.addf %23, %24 : vector<32x128xf32>
    %26 = vector.extract_strided_slice %22 {offsets = [0, 256], sizes = [32, 128], strides = [1, 1]} : vector<32x384xf32> to vector<32x128xf32>
    %27 = arith.addf %25, %26 : vector<32x128xf32>
    %28 = arith.addf %21, %27 : vector<32x128xf32>
    %c0_7 = arith.constant 0 : index
    %c0_8 = arith.constant 0 : index
    %29 = vector.load %arg5[%c0_7, %c0_8] : memref<32x128xf32, #tpu.memory_space<vmem>>, vector<32x128xf32>
    tpu.vector_store %arg5[%c0_7, %c0_8], %28 {strides = array<i32>} : memref<32x128xf32, #tpu.memory_space<vmem>>, vector<32x128xf32>,
    %c0_9 = arith.constant 0 : index
    %c0_10 = arith.constant 0 : index
    %30 = vector.load %arg6[%c0_9, %c0_10] : memref<32x128xf32, #tpu.memory_space<vmem>>, vector<32x128xf32>
    %31 = arith.addf %18, %20 : vector<32x384xf32>
    %32 = vector.extract_strided_slice %31 {offsets = [0, 0], sizes = [32, 128], strides = [1, 1]} : vector<32x384xf32> to vector<32x128xf32>
    %33 = vector.extract_strided_slice %31 {offsets = [0, 128], sizes = [32, 128], strides = [1, 1]} : vector<32x384xf32> to vector<32x128xf32>
    %34 = arith.addf %32, %33 : vector<32x128xf32>
    %35 = vector.extract_strided_slice %31 {offsets = [0, 256], sizes = [32, 128], strides = [1, 1]} : vector<32x384xf32> to vector<32x128xf32>
    %36 = arith.addf %34, %35 : vector<32x128xf32>
    %37 = arith.addf %30, %36 : vector<32x128xf32>
    %c0_11 = arith.constant 0 : index
    %c0_12 = arith.constant 0 : index
    %38 = vector.load %arg6[%c0_11, %c0_12] : memref<32x128xf32, #tpu.memory_space<vmem>>, vector<32x128xf32>
    tpu.vector_store %arg6[%c0_11, %c0_12], %37 {strides = array<i32>} : memref<32x128xf32, #tpu.memory_space<vmem>>, vector<32x128xf32>,
    %c0_i32_13 = arith.constant 0 : i32
    %39 = arith.cmpi eq, %arg1, %c0_i32_13 : i32
    %40 = arith.extui %39 : i1 to i32
    %c0_i32_14 = arith.constant 0 : i32
    %41 = arith.cmpi ne, %40, %c0_i32_14 : i32
    scf.if %41 {
      %c0_15 = arith.constant 0 : index
      %c0_16 = arith.constant 0 : index
      %42 = vector.load %arg5[%c0_15, %c0_16] : memref<32x128xf32, #tpu.memory_space<vmem>>, vector<32x128xf32>
      %cst = arith.constant dense<0.000000e+00> : vector<32xf32>
      %43 = vector.multi_reduction <add>, %42, %cst [1] : vector<32x128xf32> to vector<32xf32>
      %44 = vector.shape_cast %43 : vector<32xf32> to vector<32x1xf32>
      %c0_17 = arith.constant 0 : index
      %c0_18 = arith.constant 0 : index
      %45 = vector.load %arg6[%c0_17, %c0_18] : memref<32x128xf32, #tpu.memory_space<vmem>>, vector<32x128xf32>
      %cst_19 = arith.constant dense<0.000000e+00> : vector<32xf32>
      %46 = vector.multi_reduction <add>, %45, %cst_19 [1] : vector<32x128xf32> to vector<32xf32>
      %47 = vector.shape_cast %46 : vector<32xf32> to vector<32x1xf32>
      %cst_20 = arith.constant 2.000000e+00 : f32
      %48 = vector.broadcast %cst_20 : f32 to vector<32x1xf32>
      %49 = arith.mulf %48, %44 : vector<32x1xf32>
      %cst_21 = arith.constant 1.000000e+00 : f32
      %50 = vector.broadcast %cst_21 : f32 to vector<32x1xf32>
      %51 = arith.addf %49, %50 : vector<32x1xf32>
      %cst_22 = arith.constant 1.000000e+00 : f32
      %52 = vector.broadcast %cst_22 : f32 to vector<32x1xf32>
      %53 = arith.addf %47, %52 : vector<32x1xf32>
      %54 = arith.divf %51, %53 : vector<32x1xf32>
      %c32_i32 = arith.constant 32 : i32
      %55 = arith.muli %arg0, %c32_i32 : i32
      %56 = tpu.iota {dimensions = array<i32: 0>} : vector<32x1xi32>
      %57 = vector.broadcast %55 : i32 to vector<32x1xi32>
      %58 = arith.addi %57, %56 : vector<32x1xi32>
      %c48_i32 = arith.constant 48 : i32
      %59 = vector.broadcast %c48_i32 : i32 to vector<32x1xi32>
      %60 = arith.cmpi slt, %58, %59 : vector<32x1xi32>
      %cst_23 = arith.constant 0.000000e+00 : f32
      %61 = vector.broadcast %cst_23 : f32 to vector<32x1xf32>
      %62 = arith.select %60, %54, %61 : vector<32x1xi1>, vector<32x1xf32>
      %c0_24 = arith.constant 0 : index
      %c0_25 = arith.constant 0 : index
      %63 = vector.load %arg4[%c0_24, %c0_25] : memref<32x1xf32, #tpu.memory_space<vmem>>, vector<32x1xf32>
      tpu.vector_store %arg4[%c0_24, %c0_25], %62 {strides = array<i32>} : memref<32x1xf32, #tpu.memory_space<vmem>>, vector<32x1xf32>,
    } else {
    }
    return
  }
  func.func @transform_0(%arg0: i32, %arg1: i32) -> (i32, i32) {
    %c0_i32 = arith.constant 0 : i32
    return %arg0, %arg1 : i32, i32
  }
  func.func @transform_1(%arg0: i32, %arg1: i32) -> (i32, i32) {
    %c0_i32 = arith.constant 0 : i32
    return %arg0, %arg1 : i32, i32
  }
  func.func @transform_2(%arg0: i32, %arg1: i32) -> (i32, i32) {
    %c0_i32 = arith.constant 0 : i32
    %c0_i32_0 = arith.constant 0 : i32
    return %arg0, %c0_i32 : i32, i32
  }
}

</mosaic_0001>

<llo_original>
// kernel: tpu_custom_call.1
$region0: #{tpu_custom_call.1}
  #allocation0 [shape = 'u32[]', space=smem, size = 0x4, offset = 0x4, fixed_abs, tag = 'smem constant byte address 0x4 - core index']
  #allocation1 [shape = 'u32[144,128]{1,0:T(1,128)}', space=vmem, size = 0x12000, scoped, tag = 'internal scratch']
  #allocation2 [shape = 'f32[32,128]{1,0:T(8,128)}', space=vmem, size = 0x4000, scoped, tag = 'scratch operand']
  #allocation3 [shape = 'f32[32,128]{1,0:T(8,128)}', space=vmem, size = 0x4000, scoped, tag = 'scratch operand']
  %s0 = inlined_call_operand.hbm [shape: u8[48,300], index: 0, kind: input, shape index: {}]
  %s1 = inlined_call_operand.hbm [shape: u8[48,300], index: 1, kind: input, shape index: {}]
  %s2 = inlined_call_operand.vmem [shape: f32[48,1], index: 2, kind: output, shape index: {}]
  %s3 = sld [smem:[#allocation0]]
  $region105: #{tpu_custom_call.1} parent=0
    _
  %s5 = ssub.s32 1, %s3
  %s6 = scalar_select 0, %s5, %s3
  $region1: #{tpu_custom_call.1} parent=0
    #allocation4 [shape = 'u8[24576]{0}', space=vmem, size = 0x6000, scoped, tag = 'input window, operand 0']
    #allocation5 [shape = 's32[2]{0}', space=sflag, size = 0x8, scoped, tag = 'scoped memory for tpu_custom_call.1']
    #allocation6 [shape = 'u8[24576]{0}', space=vmem, size = 0x6000, scoped, tag = 'input window, operand 1']
    #allocation7 [shape = 's32[2]{0}', space=sflag, size = 0x8, scoped, tag = 'scoped memory for tpu_custom_call.1']
    #allocation8 [shape = 'u8[32768]{0}', space=vmem, size = 0x8000, scoped, tag = 'output window, operand 0']
    %7 = vsyncpa [#allocation5], 0
    %s8 = scalar_lea.sflag [#allocation5], 1
    %9 = vsyncpa %s8, 0
    %10 = vsyncpa [#allocation7], 0
    %s11 = scalar_lea.sflag [#allocation7], 1
    %12 = vsyncpa %s11, 0
    loop: start=0, step=1, limit=4
    $region2: #{tpu_custom_call.1} parent=1 // loop_pre_header
      _
    $region3: #{tpu_custom_call.1} parent=1 // loop_header
      %s14 = sphi 0, %s18
      %p15 = scmp.ge.s32.totalorder %s14, 4
      %s21 = sphi 0, %s33
      %s22 = sphi 0, %s29
      %s23 = sphi 0, %s21
      %s24 = sphi 0, %s22
      %s25 = sphi 0, %s23
      %s26 = sphi 0, %s24
      %s38 = sphi 0, %s40
      %s41 = sphi 0, %s38
      %s42 = sphi 0, %s41
      %s58 = sphi 0, %s42
      %s66 = sphi 0, %s68
      %s69 = sphi 0, %s66
      %s70 = sphi 0, %s69
      %s86 = sphi 0, %s70
      %s92 = sphi 0, %s94
      %s95 = sphi 0, %s92
      %s96 = sphi 0, %s95
      %s112 = sphi 0, %s96
    $region4: #{tpu_custom_call.1} parent=1 // loop_header_branch
      %17 = sbr.rel (%p15) target = $region8
    $region5: #{tpu_custom_call.1} parent=1 // loop_body
      %s19 = ssub.s32 %s14, 1
      %s20 = ssub.s32 %s14, 2
      %s27 = sadd.s32 1, %s22
      %p28 = scmp.ge.s32.totalorder %s27, 1
      %s29 = scalar_select %p28, 0, %s27
      %s30 = sadd.s32 1, %s21
      %s31 = scalar_select %p28, %s30, %s21
      %p32 = scmp.ge.s32.totalorder %s31, 2
      %s33 = scalar_select %p32, 0, %s31
      %s34 = ssub.s32 %s21, %s33
      %s35 = ssub.s32 %s22, %s29
      %s36 = sor.u32 %s34, %s35
      %p37 = scmp.eq.s32.totalorder %s36, 0
      %s39 = sadd.s32 %s38, 1
      %s40 = scalar_select %p37, %s38, %s39
      %p43 = pneg %p37
      %p44 = scmp.eq.s32.totalorder %s14, 1
      %p45 = por %p43, %p44
      %p46 = scmp.ne.s32.totalorder %s38, %s41
      %p47 = scmp.eq.s32.totalorder %s14, 0
      %p48 = por %p46, %p47
      %p49 = scmp.ne.s32.totalorder %s38, %s41
      %p50 = scmp.eq.s32.totalorder %s19, 1
      %p51 = por %p49, %p50
      %p52 = scmp.ne.s32.totalorder %s41, %s42
      %p53 = scmp.eq.s32.totalorder %s19, 0
      %p54 = por %p52, %p53
      %p55 = scmp.ne.s32.totalorder %s41, %s42
      %p56 = scmp.eq.s32.totalorder %s20, 1
      %p57 = por %p55, %p56
      %p59 = scmp.ne.s32.totalorder %s42, %s58
      %p60 = scmp.eq.s32.totalorder %s20, 0
      %p61 = por %p59, %p60
      %s62 = ssub.s32 %s21, %s33
      %s63 = ssub.s32 %s22, %s29
      %s64 = sor.u32 %s62, %s63
      %p65 = scmp.eq.s32.totalorder %s64, 0
      %s67 = sadd.s32 %s66, 1
      %s68 = scalar_select %p65, %s66, %s67
      %p71 = pneg %p65
      %p72 = scmp.eq.s32.totalorder %s14, 1
      %p73 = por %p71, %p72
      %p74 = scmp.ne.s32.totalorder %s66, %s69
      %p75 = scmp.eq.s32.totalorder %s14, 0
      %p76 = por %p74, %p75
      %p77 = scmp.ne.s32.totalorder %s66, %s69
      %p78 = scmp.eq.s32.totalorder %s19, 1
      %p79 = por %p77, %p78
      %p80 = scmp.ne.s32.totalorder %s69, %s70
      %p81 = scmp.eq.s32.totalorder %s19, 0
      %p82 = por %p80, %p81
      %p83 = scmp.ne.s32.totalorder %s69, %s70
      %p84 = scmp.eq.s32.totalorder %s20, 1
      %p85 = por %p83, %p84
      %p87 = scmp.ne.s32.totalorder %s70, %s86
      %p88 = scmp.eq.s32.totalorder %s20, 0
      %p89 = por %p87, %p88
      %s90 = ssub.s32 %s21, %s33
      %p91 = scmp.eq.s32.totalorder %s90, 0
      %s93 = sadd.s32 %s92, 1
      %s94 = scalar_select %p91, %s92, %s93
      %p97 = pneg %p91
      %p98 = scmp.eq.s32.totalorder %s14, 1
      %p99 = por %p97, %p98
      %p100 = scmp.ne.s32.totalorder %s92, %s95
      %p101 = scmp.eq.s32.totalorder %s14, 0
      %p102 = por %p100, %p101
      %p103 = scmp.ne.s32.totalorder %s92, %s95
      %p104 = scmp.eq.s32.totalorder %s19, 1
      %p105 = por %p103, %p104
      %p106 = scmp.ne.s32.totalorder %s95, %s96
      %p107 = scmp.eq.s32.totalorder %s19, 0
      %p108 = por %p106, %p107
      %p109 = scmp.ne.s32.totalorder %s95, %s96
      %p110 = scmp.eq.s32.totalorder %s20, 1
      %p111 = por %p109, %p110
      %p113 = scmp.ne.s32.totalorder %s96, %s112
      %p114 = scmp.eq.s32.totalorder %s20, 0
      %p115 = por %p113, %p114
      %p116 = scmp.le.s32.totalorder 1, %s14
      %p117 = scmp.lt.s32.totalorder %s14, 3
      %p118 = pnand %p116, %p117
      %p119 = pneg %p118
      // Predicated region
      $region9: #{tpu_custom_call.1} parent=5 // pred_check
        _
      $region10: #{tpu_custom_call.1} parent=5 // pred_check_branch
        %121 = sbr.rel (%p118) target = $region12
      $region11: #{tpu_custom_call.1} parent=5 // pred_region
        %s122 = ssub.s32 %s14, 1
      $region12: #{tpu_custom_call.1} parent=5 // pred_fallthru
        _
      %p123 = scmp.lt.s32.totalorder %s14, 2
      // Predicated region
      $region13: #{tpu_custom_call.1} parent=5 // pred_check
        %p124 = pneg %p123
      $region14: #{tpu_custom_call.1} parent=5 // pred_check_branch
        %126 = sbr.rel (%p124) target = $region16
      $region15: #{tpu_custom_call.1} parent=5 // pred_region
        // Predicated region
        $region17: #{tpu_custom_call.1} parent=15 // pred_check
          %p127 = pneg %p48
        $region18: #{tpu_custom_call.1} parent=15 // pred_check_branch
          %129 = sbr.rel (%p127) target = $region20
        $region19: #{tpu_custom_call.1} parent=15 // pred_region
          %s130 = sand.u32 %s38, 1
          %s131 = scalar_lea.sflag [#allocation5], %s130
          %s132 = sand.u32 %s38, 1
          %s133 = smul.addr %s132, 24
          %s134 = scalar_lea.vmem [#allocation4], %s133
          %s135 = smul.u32 4, %s21
          %s136 = smul.u32 3, %s22
          %s137 = ssub.s32 6, %s135
          %p138 = scmp.lt.s32.totalorder %s137, 4
          %s139 = scalar_select %p138, %s137, 4
          %s140 = smul.u32 32, %s139
          %s141 = smul.u32 %s140, 3
          %s143 = ssub.s32 384, %s141
          %144 = vsyncadd %s131, %s143
          %p145 = scmp.ne.s32.totalorder 0, %s141
          %s146 = smul.addr %s135, 3
          %s147 = sadd.s32 %s136, %s146
          %s148 = smul.addr %s147, 32
          %s149 = scalar_lea.hbm %s0, %s148
          %s150 = smul.u32 6, %s139
          %s151 = sshll.u32 %s134, 4
          %s152 = int_to_ptr.vmem [resolvable:$true] %s151
          %s153 = sshll.u32 %s150, 4
          %157 = dma.hbm_to_vmem [thread:$0]  (%p145), %s149, %s153, %s152, %s131, 96, 96, 6
        $region20: #{tpu_custom_call.1} parent=15 // pred_fallthru
          _
        // Predicated region
        $region21: #{tpu_custom_call.1} parent=15 // pred_check
          %p158 = pneg %p76
        $region22: #{tpu_custom_call.1} parent=15 // pred_check_branch
          %160 = sbr.rel (%p158) target = $region24
        $region23: #{tpu_custom_call.1} parent=15 // pred_region
          %s161 = sand.u32 %s66, 1
          %s162 = scalar_lea.sflag [#allocation7], %s161
          %s163 = sand.u32 %s66, 1
          %s164 = smul.addr %s163, 24
          %s165 = scalar_lea.vmem [#allocation6], %s164
          %s166 = smul.u32 4, %s21
          %s167 = smul.u32 3, %s22
          %s168 = ssub.s32 6, %s166
          %p169 = scmp.lt.s32.totalorder %s168, 4
          %s170 = scalar_select %p169, %s168, 4
          %s171 = smul.u32 32, %s170
          %s172 = smul.u32 %s171, 3
          %s174 = ssub.s32 384, %s172
          %175 = vsyncadd %s162, %s174
          %p176 = scmp.ne.s32.totalorder 0, %s172
          %s177 = smul.addr %s166, 3
          %s178 = sadd.s32 %s167, %s177
          %s179 = smul.addr %s178, 32
          %s180 = scalar_lea.hbm %s1, %s179
          %s181 = smul.u32 6, %s170
          %s182 = sshll.u32 %s165, 4
          %s183 = int_to_ptr.vmem [resolvable:$true] %s182
          %s184 = sshll.u32 %s181, 4
          %188 = dma.hbm_to_vmem [thread:$0]  (%p176), %s180, %s184, %s183, %s162, 96, 96, 6
        $region24: #{tpu_custom_call.1} parent=15 // pred_fallthru
          _
      $region16: #{tpu_custom_call.1} parent=5 // pred_fallthru
        _
      %p189 = scmp.le.s32.totalorder 1, %s14
      %p190 = scmp.lt.s32.totalorder %s14, 3
      %p191 = pnand %p189, %p190
      %p192 = pneg %p191
      // Predicated region
      $region25: #{tpu_custom_call.1} parent=5 // pred_check
        _
      $region26: #{tpu_custom_call.1} parent=5 // pred_check_branch
        %194 = sbr.rel (%p191) target = $region28
      $region27: #{tpu_custom_call.1} parent=5 // pred_region
        %s195 = ssub.s32 %s14, 1
        %s196 = sand.u32 %s41, 1
        %s197 = scalar_lea.sflag [#allocation5], %s196
        %s198 = sand.u32 %s41, 1
        %s199 = smul.addr %s198, 24
        %s200 = scalar_lea.vmem [#allocation4], %s199
        // Predicated region
        $region29: #{tpu_custom_call.1} parent=27 // pred_check
          %p201 = pneg %p54
        $region30: #{tpu_custom_call.1} parent=27 // pred_check_branch
          %203 = sbr.rel (%p201) target = $region32
        $region31: #{tpu_custom_call.1} parent=27 // pred_region
          %204 = dma.done %s197, 384
        $region32: #{tpu_custom_call.1} parent=27 // pred_fallthru
          _
        %s205 = sand.u32 %s69, 1
        %s206 = scalar_lea.sflag [#allocation7], %s205
        %s207 = sand.u32 %s69, 1
        %s208 = smul.addr %s207, 24
        %s209 = scalar_lea.vmem [#allocation6], %s208
        // Predicated region
        $region33: #{tpu_custom_call.1} parent=27 // pred_check
          %p210 = pneg %p82
        $region34: #{tpu_custom_call.1} parent=27 // pred_check_branch
          %212 = sbr.rel (%p210) target = $region36
        $region35: #{tpu_custom_call.1} parent=27 // pred_region
          %213 = dma.done %s206, 384
        $region36: #{tpu_custom_call.1} parent=27 // pred_fallthru
          _
        %s214 = sand.u32 %s41, 1
        %s215 = scalar_lea.sflag [#allocation5], %s214
        %s216 = sand.u32 %s41, 1
        %s217 = smul.addr %s216, 24
        %s218 = scalar_lea.vmem [#allocation4], %s217
        %p219 = pneg %p54
        %p220 = pneg %p51
        %s221 = sand.u32 %s69, 1
        %s222 = scalar_lea.sflag [#allocation7], %s221
        %s223 = sand.u32 %s69, 1
        %s224 = smul.addr %s223, 24
        %s225 = scalar_lea.vmem [#allocation6], %s224
        %p226 = pneg %p82
        %p227 = pneg %p79
        %p228 = pneg %p108
        %p229 = pneg %p105
        %s230 = sand.u32 %s95, 1
        %s231 = sand.u32 %s95, 1
        %s232 = smul.addr %s231, 32
        %s233 = scalar_lea.vmem [#allocation8], %s232
        %s234 = smul.u32 4, %s23
        %s235 = smul.u32 3, %s24
        %s236 = ssub.s32 6, %s234
        %p237 = scmp.lt.s32.totalorder %s236, 4
        %s238 = scalar_select %p237, %s236, 4
        %s239 = smul.u32 32, %s238
        %s240 = smul.u32 %s239, 3
        %s241 = smul.u32 4, %s23
        %s242 = smul.u32 3, %s24
        %s243 = ssub.s32 6, %s241
        %p244 = scmp.lt.s32.totalorder %s243, 4
        %s245 = scalar_select %p244, %s243, 4
        %s246 = smul.u32 32, %s245
        %s247 = smul.u32 %s246, 3
        %s248 = smul.u32 4, %s23
        %s249 = ssub.s32 6, %s248
        %p250 = scmp.lt.s32.totalorder %s249, 4
        %s251 = scalar_select %p250, %s249, 4
        %s252 = smul.u32 128, %s251
        %p255 = scmp.eq.s32.totalorder %s24, 0
        // Predicated region
        $region37: #{tpu_custom_call.1} parent=27 // pred_check
          %p256 = pneg %p255
        $region38: #{tpu_custom_call.1} parent=27 // pred_check_branch
          %258 = sbr.rel (%p256) target = $region40
        $region39: #{tpu_custom_call.1} parent=27 // pred_region
          %259 = vst [vmem:[#allocation2] sm:$0xff] 0.0
          %260 = vst [vmem:[#allocation2 + $0x8] sm:$0xff] 0.0
          %261 = vst [vmem:[#allocation2 + $0x10] sm:$0xff] 0.0
          %262 = vst [vmem:[#allocation2 + $0x18] sm:$0xff] 0.0
          %263 = vst [vmem:[#allocation3] sm:$0xff] 0.0
          %264 = vst [vmem:[#allocation3 + $0x8] sm:$0xff] 0.0
          %265 = vst [vmem:[#allocation3 + $0x10] sm:$0xff] 0.0
          %266 = vst [vmem:[#allocation3 + $0x18] sm:$0xff] 0.0
        $region40: #{tpu_custom_call.1} parent=27 // pred_fallthru
          _
        %v267 = vld [vmem:[%s209] sm:$0x3f]
        %v268 = vld [vmem:[%s209 + $0x6] sm:$0x3f]
        %v269 = vld [vmem:[%s209 + $0xc] sm:$0x3f]
        %v270 = vld [vmem:[%s209 + $0x12] sm:$0x3f]
        %v271 = vld [vmem:[%s200] sm:$0x3f]
        %v272 = vld [vmem:[%s200 + $0x6] sm:$0x3f]
        %v273 = vld [vmem:[%s200 + $0xc] sm:$0x3f]
        %v274 = vld [vmem:[%s200 + $0x12] sm:$0x3f]
        %vm275 = vnez %v267
        %vm276 = vnez %v268
        %vm277 = vnez %v269
        %vm278 = vnez %v270
        %vm279 = vnez %v271
        %vm280 = vnez %v272
        %vm281 = vnez %v273
        %vm282 = vnez %v274
        %s283 = smul.u32 %s24, 384
        %v284 = vlaneseq
        %v285 = vand.u32 %v284, 127
        %v286 = vadd.s32 %v285, 128
        %v287 = vadd.s32 %v285, 256
        %v288 = vstv %s283
        %v289 = vadd.s32 %v288, %v285
        %v290 = vadd.s32 %v288, %v286
        %v291 = vadd.s32 %v288, %v287
        %vm292 = vcmp.lt.s32.totalorder %v289, 300
        %vm293 = vcmp.lt.s32.totalorder %v290, 300
        %vm294 = vcmp.lt.s32.totalorder %v291, 300
        %vm295 = vmpackc.low %vm293, %vm292
        %vm296 = vmpackc.low %vm294, %vm294
        %vm297 = vmpackc.even %vm296, %vm295
        %vm298 = vmand %vm275, %vm297
        %vm299 = vmand %vm276, %vm297
        %vm300 = vmand %vm277, %vm297
        %vm301 = vmand %vm278, %vm297
        %vm302 = vmand %vm279, %vm297
        %vm303 = vmand %vm280, %vm297
        %vm304 = vmand %vm281, %vm297
        %vm305 = vmand %vm282, %vm297
        %v306 = vsel %vm298, 16843009, 0
        %v307 = vsel %vm299, 16843009, 0
        %v308 = vsel %vm300, 16843009, 0
        %v309 = vsel %vm301, 16843009, 0
        %v310 = vunpack.c.0.s8 %v306
        %v311 = vunpack.c.1.s8 %v306
        %v312 = vunpack.c.2.s8 %v306
        %v313 = vunpack.c.0.s8 %v307
        %v314 = vunpack.c.1.s8 %v307
        %v315 = vunpack.c.2.s8 %v307
        %v316 = vunpack.c.0.s8 %v308
        %v317 = vunpack.c.1.s8 %v308
        %v318 = vunpack.c.2.s8 %v308
        %v319 = vunpack.c.0.s8 %v309
        %v320 = vunpack.c.1.s8 %v309
        %v321 = vunpack.c.2.s8 %v309
        %vm322 = vcmp.ne.s32.totalorder %v310, 0
        %vm323 = vcmp.ne.s32.totalorder %v311, 0
        %vm324 = vcmp.ne.s32.totalorder %v312, 0
        %vm325 = vcmp.ne.s32.totalorder %v313, 0
        %vm326 = vcmp.ne.s32.totalorder %v314, 0
        %vm327 = vcmp.ne.s32.totalorder %v315, 0
        %vm328 = vcmp.ne.s32.totalorder %v316, 0
        %vm329 = vcmp.ne.s32.totalorder %v317, 0
        %vm330 = vcmp.ne.s32.totalorder %v318, 0
        %vm331 = vcmp.ne.s32.totalorder %v319, 0
        %vm332 = vcmp.ne.s32.totalorder %v320, 0
        %vm333 = vcmp.ne.s32.totalorder %v321, 0
        %v334 = vsel %vm322, 1, 0
        %v335 = vsel %vm323, 1, 0
        %v336 = vsel %vm324, 1, 0
        %v337 = vsel %vm325, 1, 0
        %v338 = vsel %vm326, 1, 0
        %v339 = vsel %vm327, 1, 0
        %v340 = vsel %vm328, 1, 0
        %v341 = vsel %vm329, 1, 0
        %v342 = vsel %vm330, 1, 0
        %v343 = vsel %vm331, 1, 0
        %v344 = vsel %vm332, 1, 0
        %v345 = vsel %vm333, 1, 0
        %v346 = vcvt.s32.f32 %v334
        %v347 = vcvt.s32.f32 %v335
        %v348 = vcvt.s32.f32 %v336
        %v349 = vcvt.s32.f32 %v337
        %v350 = vcvt.s32.f32 %v338
        %v351 = vcvt.s32.f32 %v339
        %v352 = vcvt.s32.f32 %v340
        %v353 = vcvt.s32.f32 %v341
        %v354 = vcvt.s32.f32 %v342
        %v355 = vcvt.s32.f32 %v343
        %v356 = vcvt.s32.f32 %v344
        %v357 = vcvt.s32.f32 %v345
        %v358 = vsel %vm302, 16843009, 0
        %v359 = vsel %vm303, 16843009, 0
        %v360 = vsel %vm304, 16843009, 0
        %v361 = vsel %vm305, 16843009, 0
        %v362 = vunpack.c.0.s8 %v358
        %v363 = vunpack.c.1.s8 %v358
        %v364 = vunpack.c.2.s8 %v358
        %v365 = vunpack.c.0.s8 %v359
        %v366 = vunpack.c.1.s8 %v359
        %v367 = vunpack.c.2.s8 %v359
        %v368 = vunpack.c.0.s8 %v360
        %v369 = vunpack.c.1.s8 %v360
        %v370 = vunpack.c.2.s8 %v360
        %v371 = vunpack.c.0.s8 %v361
        %v372 = vunpack.c.1.s8 %v361
        %v373 = vunpack.c.2.s8 %v361
        %vm374 = vcmp.ne.s32.totalorder %v362, 0
        %vm375 = vcmp.ne.s32.totalorder %v363, 0
        %vm376 = vcmp.ne.s32.totalorder %v364, 0
        %vm377 = vcmp.ne.s32.totalorder %v365, 0
        %vm378 = vcmp.ne.s32.totalorder %v366, 0
        %vm379 = vcmp.ne.s32.totalorder %v367, 0
        %vm380 = vcmp.ne.s32.totalorder %v368, 0
        %vm381 = vcmp.ne.s32.totalorder %v369, 0
        %vm382 = vcmp.ne.s32.totalorder %v370, 0
        %vm383 = vcmp.ne.s32.totalorder %v371, 0
        %vm384 = vcmp.ne.s32.totalorder %v372, 0
        %vm385 = vcmp.ne.s32.totalorder %v373, 0
        %v386 = vsel %vm374, 1, 0
        %v387 = vsel %vm375, 1, 0
        %v388 = vsel %vm376, 1, 0
        %v389 = vsel %vm377, 1, 0
        %v390 = vsel %vm378, 1, 0
        %v391 = vsel %vm379, 1, 0
        %v392 = vsel %vm380, 1, 0
        %v393 = vsel %vm381, 1, 0
        %v394 = vsel %vm382, 1, 0
        %v395 = vsel %vm383, 1, 0
        %v396 = vsel %vm384, 1, 0
        %v397 = vsel %vm385, 1, 0
        %v398 = vcvt.s32.f32 %v386
        %v399 = vcvt.s32.f32 %v387
        %v400 = vcvt.s32.f32 %v388
        %v401 = vcvt.s32.f32 %v389
        %v402 = vcvt.s32.f32 %v390
        %v403 = vcvt.s32.f32 %v391
        %v404 = vcvt.s32.f32 %v392
        %v405 = vcvt.s32.f32 %v393
        %v406 = vcvt.s32.f32 %v394
        %v407 = vcvt.s32.f32 %v395
        %v408 = vcvt.s32.f32 %v396
        %v409 = vcvt.s32.f32 %v397
        %v410 = vld [vmem:[#allocation2] sm:$0xff]
        %v411 = vld [vmem:[#allocation2 + $0x8] sm:$0xff]
        %v412 = vld [vmem:[#allocation2 + $0x10] sm:$0xff]
        %v413 = vld [vmem:[#allocation2 + $0x18] sm:$0xff]
        %v414 = vmul.f32 %v346, %v398
        %v415 = vmul.f32 %v347, %v399
        %v416 = vmul.f32 %v348, %v400
        %v417 = vmul.f32 %v349, %v401
        %v418 = vmul.f32 %v350, %v402
        %v419 = vmul.f32 %v351, %v403
        %v420 = vmul.f32 %v352, %v404
        %v421 = vmul.f32 %v353, %v405
        %v422 = vmul.f32 %v354, %v406
        %v423 = vmul.f32 %v355, %v407
        %v424 = vmul.f32 %v356, %v408
        %v425 = vmul.f32 %v357, %v409
        %v426 = vadd.f32 %v414, %v415
        %v427 = vadd.f32 %v417, %v418
        %v428 = vadd.f32 %v420, %v421
        %v429 = vadd.f32 %v423, %v424
        %v430 = vadd.f32 %v426, %v416
        %v431 = vadd.f32 %v427, %v419
        %v432 = vadd.f32 %v428, %v422
        %v433 = vadd.f32 %v429, %v425
        %v434 = vadd.f32 %v410, %v430
        %v435 = vadd.f32 %v411, %v431
        %v436 = vadd.f32 %v412, %v432
        %v437 = vadd.f32 %v413, %v433
        %438 = vst [vmem:[#allocation2] sm:$0xff] %v434
        %439 = vst [vmem:[#allocation2 + $0x8] sm:$0xff] %v435
        %440 = vst [vmem:[#allocation2 + $0x10] sm:$0xff] %v436
        %441 = vst [vmem:[#allocation2 + $0x18] sm:$0xff] %v437
        %v442 = vld [vmem:[#allocation3] sm:$0xff]
        %v443 = vld [vmem:[#allocation3 + $0x8] sm:$0xff]
        %v444 = vld [vmem:[#allocation3 + $0x10] sm:$0xff]
        %v445 = vld [vmem:[#allocation3 + $0x18] sm:$0xff]
        %v446 = vadd.f32 %v346, %v398
        %v447 = vadd.f32 %v347, %v399
        %v448 = vadd.f32 %v348, %v400
        %v449 = vadd.f32 %v349, %v401
        %v450 = vadd.f32 %v350, %v402
        %v451 = vadd.f32 %v351, %v403
        %v452 = vadd.f32 %v352, %v404
        %v453 = vadd.f32 %v353, %v405
        %v454 = vadd.f32 %v354, %v406
        %v455 = vadd.f32 %v355, %v407
        %v456 = vadd.f32 %v356, %v408
        %v457 = vadd.f32 %v357, %v409
        %v458 = vadd.f32 %v446, %v447
        %v459 = vadd.f32 %v449, %v450
        %v460 = vadd.f32 %v452, %v453
        %v461 = vadd.f32 %v455, %v456
        %v462 = vadd.f32 %v458, %v448
        %v463 = vadd.f32 %v459, %v451
        %v464 = vadd.f32 %v460, %v454
        %v465 = vadd.f32 %v461, %v457
        %v466 = vadd.f32 %v442, %v462
        %v467 = vadd.f32 %v443, %v463
        %v468 = vadd.f32 %v444, %v464
        %v469 = vadd.f32 %v445, %v465
        %470 = vst [vmem:[#allocation3] sm:$0xff] %v466
        %471 = vst [vmem:[#allocation3 + $0x8] sm:$0xff] %v467
        %472 = vst [vmem:[#allocation3 + $0x10] sm:$0xff] %v468
        %473 = vst [vmem:[#allocation3 + $0x18] sm:$0xff] %v469
        // Predicated region
        $region41: #{tpu_custom_call.1} parent=27 // pred_check
          %p474 = pneg %p255
        $region42: #{tpu_custom_call.1} parent=27 // pred_check_branch
          %476 = sbr.rel (%p474) target = $region44
        $region43: #{tpu_custom_call.1} parent=27 // pred_region
          %v477 = vld [vmem:[#allocation2] sm:$0xff]
          %v478 = vld [vmem:[#allocation2 + $0x8] sm:$0xff]
          %v479 = vld [vmem:[#allocation2 + $0x10] sm:$0xff]
          %v480 = vld [vmem:[#allocation2 + $0x18] sm:$0xff]
          %481 = vadd.xlane.f32.xlu0 %v477
          %v482 = vpop.xlane.xlu0 %481
          %483 = vadd.xlane.f32.xlu0 %v478
          %v484 = vpop.xlane.xlu0 %483
          %485 = vadd.xlane.f32.xlu0 %v479
          %v486 = vpop.xlane.xlu0 %485
          %487 = vadd.xlane.f32.xlu0 %v480
          %v488 = vpop.xlane.xlu0 %487
          %v489 = vld [vmem:[#allocation3] sm:$0xff]
          %v490 = vld [vmem:[#allocation3 + $0x8] sm:$0xff]
          %v491 = vld [vmem:[#allocation3 + $0x10] sm:$0xff]
          %v492 = vld [vmem:[#allocation3 + $0x18] sm:$0xff]
          %493 = vadd.xlane.f32.xlu0 %v489
          %v494 = vpop.xlane.xlu0 %493
          %495 = vadd.xlane.f32.xlu0 %v490
          %v496 = vpop.xlane.xlu0 %495
          %497 = vadd.xlane.f32.xlu0 %v491
          %v498 = vpop.xlane.xlu0 %497
          %499 = vadd.xlane.f32.xlu0 %v492
          %v500 = vpop.xlane.xlu0 %499
          %v501 = vmul.f32 %v482, 2.0
          %v502 = vmul.f32 %v484, 2.0
          %v503 = vmul.f32 %v486, 2.0
          %v504 = vmul.f32 %v488, 2.0
          %v505 = vadd.f32 %v501, 1.0
          %v506 = vadd.f32 %v502, 1.0
          %v507 = vadd.f32 %v503, 1.0
          %v508 = vadd.f32 %v504, 1.0
          %v509 = vadd.f32 %v494, 1.0
          %v510 = vadd.f32 %v496, 1.0
          %v511 = vadd.f32 %v498, 1.0
          %v512 = vadd.f32 %v500, 1.0
          %v513 = vrcp.pop %v509
          %v514 = vmul.f32 %v505, %v513
          %v515 = vrcp.pop %v510
          %v516 = vmul.f32 %v506, %v515
          %v517 = vrcp.pop %v511
          %v518 = vmul.f32 %v507, %v517
          %v519 = vrcp.pop %v512
          %v520 = vmul.f32 %v508, %v519
          %s521 = smul.u32 %s23, 32
          %v522 = vlaneseq
          %v523 = vshrl.u32 %v522, 7
          %v524 = vadd.s32 %v523, 8
          %v525 = vadd.s32 %v523, 16
          %v526 = vadd.s32 %v523, 24
          %v527 = vstv %s521
          %v528 = vadd.s32 %v527, %v523
          %v529 = vadd.s32 %v527, %v524
          %v530 = vadd.s32 %v527, %v525
          %v531 = vadd.s32 %v527, %v526
          %vm532 = vcmp.lt.s32.totalorder %v528, 48
          %vm533 = vcmp.lt.s32.totalorder %v529, 48
          %vm534 = vcmp.lt.s32.totalorder %v530, 48
          %vm535 = vcmp.lt.s32.totalorder %v531, 48
          %v536 = vsel %vm532, %v514, 0.0
          %v537 = vsel %vm533, %v516, 0.0
          %v538 = vsel %vm534, %v518, 0.0
          %v539 = vsel %vm535, %v520, 0.0
          %vm540 = vcmask 7168
          %541 = vst.msk [vmem:[%s233] sm:$0xff] %vm540, %v536
          %542 = vst.msk [vmem:[%s233 + $0x8] sm:$0xff] %vm540, %v537
          %543 = vst.msk [vmem:[%s233 + $0x10] sm:$0xff] %vm540, %v538
          %544 = vst.msk [vmem:[%s233 + $0x18] sm:$0xff] %vm540, %v539
        $region44: #{tpu_custom_call.1} parent=27 // pred_fallthru
          _
        %s545 = sand.u32 %s95, 1
        %s546 = sand.u32 %s95, 1
        %s547 = smul.addr %s546, 32
        %s548 = scalar_lea.vmem [#allocation8], %s547
        // Predicated region
        $region45: #{tpu_custom_call.1} parent=27 // pred_check
          %p549 = pneg %p105
        $region46: #{tpu_custom_call.1} parent=27 // pred_check_branch
          %551 = sbr.rel (%p549) target = $region48
        $region47: #{tpu_custom_call.1} parent=27 // pred_region
          %s552 = smul.u32 4, %s23
          %s553 = ssub.s32 6, %s552
          %p554 = scmp.lt.s32.totalorder %s553, 4
          %s555 = scalar_select %p554, %s553, 4
          %s556 = smul.u32 128, %s555
          %p557 = scmp.ne.s32.totalorder 0, %s556
          %s558 = smul.addr %s552, 8
          %s559 = scalar_lea.vmem %s2, %s558
          // Predicated region
          $region49: #{tpu_custom_call.1} parent=47 // pred_check
            %p560 = pneg %p557
          $region50: #{tpu_custom_call.1} parent=47 // pred_check_branch
            %562 = sbr.rel (%p560) target = $region52
          $region51: #{tpu_custom_call.1} parent=47 // pred_region
            // Predicated region
            $region53: #{tpu_custom_call.1} parent=51 // pred_check
              _
            $region54: #{tpu_custom_call.1} parent=51 // pred_check_branch
              %564 = sbr.rel (0) target = $region56
            $region55: #{tpu_custom_call.1} parent=51 // pred_region
              // Predicated region
              $region75: #{tpu_custom_call.1} parent=55 // pred_check
                _
              $region76: #{tpu_custom_call.1} parent=55 // pred_check_branch
                %620 = sbr.rel (0) target = $region78
              $region77: #{tpu_custom_call.1} parent=55 // pred_region
                %s621 = sshrl.u32 %s555, 2
                // While loop
                $region79: #{tpu_custom_call.1} parent=77 // loop_pre_header
                  _
                $region80: #{tpu_custom_call.1} parent=77 // loop_header
                  %s623 = sphi 0, %s625
                  %p624 = scmp.ge.s32.totalorder %s623, %s621
                  %s628 = sphi 0, %s641
                  %s629 = sphi %s548, %s644
                  %s630 = sphi %s559, %s645
                $region81: #{tpu_custom_call.1} parent=77 // loop_header_branch
                  %627 = sbr.rel (%p624) target = $region85
                $region82: #{tpu_custom_call.1} parent=77 // loop_body
                  %v631 = vld [vmem:[%s629] sm:$0xff]
                  %632 = vst [vmem:[%s630] sm:$0xff] %v631
                  %v633 = vld [vmem:[%s629 + $0x8] sm:$0xff]
                  %634 = vst [vmem:[%s630 + $0x8] sm:$0xff] %v633
                  %v635 = vld [vmem:[%s629 + $0x10] sm:$0xff]
                  %636 = vst [vmem:[%s630 + $0x10] sm:$0xff] %v635
                  %v637 = vld [vmem:[%s629 + $0x18] sm:$0xff]
                  %638 = vst [vmem:[%s630 + $0x18] sm:$0xff] %v637
                  %s639 = sadd.s32 1, %s628
                  %p640 = scmp.ge.s32.totalorder %s639, %s621
                  %s641 = scalar_select %p640, 0, %s639
                  %s642 = smul.u32 %s641, 32
                  %s643 = smul.u32 %s641, 32
                  %s644 = scalar_lea.vmem %s548, %s642 [#allocation8]
                  %s645 = scalar_lea.vmem %s559, %s643
                $region83: #{tpu_custom_call.1} parent=77 // loop_footer
                  %s625 = sadd.s32 %s623, 1
                $region84: #{tpu_custom_call.1} parent=77 // loop_footer_branch
                  %622 = sbr.rel target = $region80
                $region85: #{tpu_custom_call.1} parent=77 // loop_exit
                  _
                %s646 = sshrl.u32 %s555, 2
                %s647 = sand.u32 %s555, 3
                %s648 = smul.u32 %s646, 4
                %s649 = smul.u32 8, %s648
                %s650 = scalar_lea.vmem %s548, %s649 [#allocation8]
                %s651 = smul.u32 8, %s648
                %s652 = scalar_lea.vmem %s559, %s651
                // While loop
                $region86: #{tpu_custom_call.1} parent=77 // loop_pre_header
                  _
                $region87: #{tpu_custom_call.1} parent=77 // loop_header
                  %s654 = sphi 0, %s656
                  %p655 = scmp.ge.s32.totalorder %s654, %s647
                  %s659 = sphi 0, %s666
                  %s660 = sphi %s650, %s669
                  %s661 = sphi %s652, %s670
                $region88: #{tpu_custom_call.1} parent=77 // loop_header_branch
                  %658 = sbr.rel (%p655) target = $region92
                $region89: #{tpu_custom_call.1} parent=77 // loop_body
                  %v662 = vld [vmem:[%s660] sm:$0xff]
                  %663 = vst [vmem:[%s661] sm:$0xff] %v662
                  %s664 = sadd.s32 1, %s659
                  %p665 = scmp.ge.s32.totalorder %s664, %s647
                  %s666 = scalar_select %p665, 0, %s664
                  %s667 = smul.u32 %s666, 8
                  %s668 = smul.u32 %s666, 8
                  %s669 = scalar_lea.vmem %s650, %s667 [#allocation8]
                  %s670 = scalar_lea.vmem %s652, %s668
                $region90: #{tpu_custom_call.1} parent=77 // loop_footer
                  %s656 = sadd.s32 %s654, 1
                $region91: #{tpu_custom_call.1} parent=77 // loop_footer_branch
                  %653 = sbr.rel target = $region87
                $region92: #{tpu_custom_call.1} parent=77 // loop_exit
                  _
              $region78: #{tpu_custom_call.1} parent=55 // pred_fallthru
                _
              // Predicated region
              $region93: #{tpu_custom_call.1} parent=55 // pred_check
                _
              $region94: #{tpu_custom_call.1} parent=55 // pred_check_branch
                %672 = sbr.rel target = $region96
              $region95: #{tpu_custom_call.1} parent=55 // pred_region
                _
              $region96: #{tpu_custom_call.1} parent=55 // pred_fallthru
                _
            $region56: #{tpu_custom_call.1} parent=51 // pred_fallthru
              _
            // Predicated region
            $region57: #{tpu_custom_call.1} parent=51 // pred_check
              _
            $region58: #{tpu_custom_call.1} parent=51 // pred_check_branch
              %566 = sbr.rel target = $region60
            $region59: #{tpu_custom_call.1} parent=51 // pred_region
              %s568 = ssub.s32 256, 1
              %s569 = sshrl.u32 %s555, 2
              // While loop
              $region61: #{tpu_custom_call.1} parent=59 // loop_pre_header
                _
              $region62: #{tpu_custom_call.1} parent=59 // loop_header
                %s571 = sphi 0, %s573
                %p572 = scmp.ge.s32.totalorder %s571, %s569
                %s576 = sphi 0, %s589
                %s577 = sphi %s548, %s592
                %s578 = sphi %s559, %s593
              $region63: #{tpu_custom_call.1} parent=59 // loop_header_branch
                %575 = sbr.rel (%p572) target = $region67
              $region64: #{tpu_custom_call.1} parent=59 // loop_body
                %v579 = vld [vmem:[%s577] sm:%s568]
                %580 = vst [vmem:[%s578] sm:%s568] %v579
                %v581 = vld [vmem:[%s577 + $0x8] sm:%s568]
                %582 = vst [vmem:[%s578 + $0x8] sm:%s568] %v581
                %v583 = vld [vmem:[%s577 + $0x10] sm:%s568]
                %584 = vst [vmem:[%s578 + $0x10] sm:%s568] %v583
                %v585 = vld [vmem:[%s577 + $0x18] sm:%s568]
                %586 = vst [vmem:[%s578 + $0x18] sm:%s568] %v585
                %s587 = sadd.s32 1, %s576
                %p588 = scmp.ge.s32.totalorder %s587, %s569
                %s589 = scalar_select %p588, 0, %s587
                %s590 = smul.u32 %s589, 32
                %s591 = smul.u32 %s589, 32
                %s592 = scalar_lea.vmem %s548, %s590 [#allocation8]
                %s593 = scalar_lea.vmem %s559, %s591
              $region65: #{tpu_custom_call.1} parent=59 // loop_footer
                %s573 = sadd.s32 %s571, 1
              $region66: #{tpu_custom_call.1} parent=59 // loop_footer_branch
                %570 = sbr.rel target = $region62
              $region67: #{tpu_custom_call.1} parent=59 // loop_exit
                _
              %s594 = sshrl.u32 %s555, 2
              %s595 = sand.u32 %s555, 3
              %s596 = smul.u32 %s594, 4
              %s597 = smul.u32 8, %s596
              %s598 = scalar_lea.vmem %s548, %s597 [#allocation8]
              %s599 = smul.u32 8, %s596
              %s600 = scalar_lea.vmem %s559, %s599
              // While loop
              $region68: #{tpu_custom_call.1} parent=59 // loop_pre_header
                _
              $region69: #{tpu_custom_call.1} parent=59 // loop_header
                %s602 = sphi 0, %s604
                %p603 = scmp.ge.s32.totalorder %s602, %s595
                %s607 = sphi 0, %s614
                %s608 = sphi %s598, %s617
                %s609 = sphi %s600, %s618
              $region70: #{tpu_custom_call.1} parent=59 // loop_header_branch
                %606 = sbr.rel (%p603) target = $region74
              $region71: #{tpu_custom_call.1} parent=59 // loop_body
                %v610 = vld [vmem:[%s608] sm:%s568]
                %611 = vst [vmem:[%s609] sm:%s568] %v610
                %s612 = sadd.s32 1, %s607
                %p613 = scmp.ge.s32.totalorder %s612, %s595
                %s614 = scalar_select %p613, 0, %s612
                %s615 = smul.u32 %s614, 8
                %s616 = smul.u32 %s614, 8
                %s617 = scalar_lea.vmem %s598, %s615 [#allocation8]
                %s618 = scalar_lea.vmem %s600, %s616
              $region72: #{tpu_custom_call.1} parent=59 // loop_footer
                %s604 = sadd.s32 %s602, 1
              $region73: #{tpu_custom_call.1} parent=59 // loop_footer_branch
                %601 = sbr.rel target = $region69
              $region74: #{tpu_custom_call.1} parent=59 // loop_exit
                _
            $region60: #{tpu_custom_call.1} parent=51 // pred_fallthru
              _
          $region52: #{tpu_custom_call.1} parent=47 // pred_fallthru
            _
          %673 = vnop
        $region48: #{tpu_custom_call.1} parent=27 // pred_fallthru
          _
      $region28: #{tpu_custom_call.1} parent=5 // pred_fallthru
        _
      %p674 = scmp.le.s32.totalorder 2, %s14
      // Predicated region
      $region97: #{tpu_custom_call.1} parent=5 // pred_check
        %p675 = pneg %p674
      $region98: #{tpu_custom_call.1} parent=5 // pred_check_branch
        %677 = sbr.rel (%p675) target = $region100
      $region99: #{tpu_custom_call.1} parent=5 // pred_region
        %s678 = ssub.s32 %s14, 2
        // Predicated region
        $region101: #{tpu_custom_call.1} parent=99 // pred_check
          %p679 = pneg %p111
        $region102: #{tpu_custom_call.1} parent=99 // pred_check_branch
          %681 = sbr.rel (%p679) target = $region104
        $region103: #{tpu_custom_call.1} parent=99 // pred_region
          %s682 = sand.u32 %s96, 1
          %s683 = sand.u32 %s96, 1
          %s684 = smul.addr %s683, 32
          %s685 = scalar_lea.vmem [#allocation8], %s684
        $region104: #{tpu_custom_call.1} parent=99 // pred_fallthru
          _
      $region100: #{tpu_custom_call.1} parent=5 // pred_fallthru
        _
    $region6: #{tpu_custom_call.1} parent=1 // loop_footer
      %s18 = sadd.s32 1, %s14
    $region7: #{tpu_custom_call.1} parent=1 // loop_footer_branch
      %13 = sbr.rel target = $region3
    $region8: #{tpu_custom_call.1} parent=1 // loop_exit
      _
    %686 = vsyncpa [#allocation5], 1
    %s687 = scalar_lea.sflag [#allocation5], 1
    %688 = vsyncpa %s687, 1
    %689 = vsyncpa [#allocation7], 1
    %s690 = scalar_lea.sflag [#allocation7], 1
    %691 = vsyncpa %s690, 1

</llo_original>
